<compile_context>
chip_gen: v6e
topology: v6e:2x2x1
jax: 0.10.0
libtpu: 0.0.40
codegen_flags: <defaults>
</compile_context>

<pallas_src>
import jax
import jax.numpy as jnp
from jax.experimental import pallas as pl
from jax.experimental.pallas import tpu as pltpu


_NEG_FILL = -1e30  # softmax pad-column bias: exp(_NEG_FILL - m) == 0 exactly in f32


def _round_up(x, m):
    return -(-x // m) * m


def _multi_objective_kernel(
    x_ref,
    w1p1_ref, b1pb1_ref,                  # fused layer-1 of both networks: [w1 | p1], [b1 | pb1]
    w2_ref, b2_ref,                       # weight_network head (output lane-padded to 128)
    p2_ref, pb2_ref, p3_ref, pb3_ref,     # pareto_network layers 2 and 3 (p3 lane-padded to 128)
    out_ref,                              # lane-packed output: [weights(128) | pareto(128)]
):
    h_pad = p2_ref.shape[0]               # lane-padded hidden dim (static)
    now = w2_ref.shape[1]                 # lane-padded per-head output width (static, mult of 128)

    x = x_ref[...]

    # ---- fused first layer (one MXU pass for both networks) + ReLU ----
    h_all = jnp.dot(x, w1p1_ref[...], preferred_element_type=jnp.float32) + b1pb1_ref[...]
    h_all = jnp.maximum(h_all, 0.0)
    h = h_all[:, :h_pad]                  # weight_network hidden  (lane-tile-aligned slice)
    h1 = h_all[:, h_pad:]                 # pareto_network hidden

    # ---- weight_network head: Linear -> Softmax(dim=-1) ----
    # Padded logit columns carry bias -1e30, so their exp underflows to exactly
    # zero and the full 128-lane softmax matches the num_obj-lane softmax.
    logits = jnp.dot(h, w2_ref[...], preferred_element_type=jnp.float32) + b2_ref[...]
    m = jnp.max(logits, axis=-1, keepdims=True)
    e = jnp.exp(logits - m)
    d = jnp.sum(e, axis=-1, keepdims=True)
    r = pl.reciprocal(d, approx=True)     # EUP slot (otherwise idle)
    r = r * (2.0 - d * r)                 # one Newton step -> back to ~full f32 accuracy
    weights = e * r

    # ---- pareto_network tail: Linear -> ReLU -> Linear ----
    h2 = jnp.dot(h1, p2_ref[...], preferred_element_type=jnp.float32) + pb2_ref[...]
    h2 = jnp.maximum(h2, 0.0)
    pareto = jnp.dot(h2, p3_ref[...], preferred_element_type=jnp.float32) + pb3_ref[...]

    # Two 128-lane-aligned slice stores: full-lane unmasked vst, dense output DMA.
    out_ref[:, :now] = weights
    out_ref[:, now:] = pareto


def _pick_batch_tile(B, batch_tile):
    """>= ~8 grid steps for large B (megacore on v7x), >= 512 rows per tile."""
    if B <= 512:
        return B                          # single full-extent tile
    tb = _round_up(pl.cdiv(B, 8), 8)
    return max(512, min(batch_tile, tb))


def multi_objective_optimization(objectives, params, *, batch_tile=2048):
    """Fused forward pass. Returns (weights, pareto_points)."""
    B, num_obj = objectives.shape
    hidden = params["w1"].shape[1]
    h_pad = _round_up(hidden, 128)        # lane-pad hidden so intermediates are full-lane
    now = _round_up(num_obj, 128)         # lane-pad per-head output width (dense stores/DMA)

    f32 = jnp.float32

    def pad2(a, rows, cols, fill=0.0):
        a = jnp.asarray(a, f32).reshape((-1, a.shape[-1]))
        return jnp.pad(a, ((0, rows - a.shape[0]), (0, cols - a.shape[1])),
                       constant_values=fill)

    # Fuse the shared-LHS first layers and zero-pad hidden to the lane multiple.
    w1p1 = jnp.concatenate(
        [pad2(params["w1"], num_obj, h_pad), pad2(params["p1"], num_obj, h_pad)], axis=1)
    b1pb1 = jnp.concatenate(
        [pad2(params["b1"], 1, h_pad), pad2(params["pb1"], 1, h_pad)], axis=1)
    w2 = pad2(params["w2"], h_pad, now)
    b2 = pad2(params["b2"], 1, now, fill=_NEG_FILL)   # -1e30 pad -> exp underflows to 0
    p2 = pad2(params["p2"], h_pad, h_pad)
    pb2 = pad2(params["pb2"], 1, h_pad)
    p3 = pad2(params["p3"], h_pad, now)
    pb3 = pad2(params["pb3"], 1, now)

    # Batch tile: generation-aware (see _pick_batch_tile).  Note: when B is not
    # a multiple of tb the last partial tile computes exp/softmax on padding
    # rows; the masked writeback keeps valid outputs exact.
    tb = _pick_batch_tile(B, batch_tile)
    grid = (pl.cdiv(B, tb),)

    # Constant index_map -> parameter blocks stay VMEM-resident across steps.
    # TODO(synk): pipeline_mode=pl.Buffered(1) would drop their second VMEM
    # buffer (~0.5 MiB); headroom is ample so defaults are kept for portability.
    resident = lambda shape: pl.BlockSpec(shape, lambda i: (0, 0))

    packed = pl.pallas_call(
        _multi_objective_kernel,
        out_shape=jax.ShapeDtypeStruct((B, 2 * now), f32),
        grid=grid,
        in_specs=[
            pl.BlockSpec((tb, num_obj), lambda i: (i, 0)),   # objectives: tiled over batch
            resident((num_obj, 2 * h_pad)), resident((1, 2 * h_pad)),
            resident((h_pad, now)), resident((1, now)),
            resident((h_pad, h_pad)), resident((1, h_pad)),
            resident((h_pad, now)), resident((1, now)),
        ],
        out_specs=pl.BlockSpec((tb, 2 * now), lambda i: (i, 0)),
        compiler_params=pltpu.CompilerParams(
            dimension_semantics=("parallel",),     # shard batch steps across TCs on v7x
            vmem_limit_bytes=48 * 1024 * 1024,     # > v5e 16-MiB default, < v7x 64-MiB physical
        ),
    )(objectives.astype(f32), w1p1, b1pb1, w2, b2, p2, pb2, p3, pb3)

    return packed[:, :num_obj], packed[:, now:now + num_obj]


def init_params(key, num_objectives, hidden_dim):
    """Deterministic init mimicking nn.Linear default (uniform +-1/sqrt(fan_in)).

    Weights stored (in_features, out_features); biases stored as (1, out)."""
    def linear(k, fan_in, fan_out):
        kw, kb = jax.random.split(k)
        bound = 1.0 / jnp.sqrt(float(fan_in))
        w = jax.random.uniform(kw, (fan_in, fan_out), jnp.float32, -bound, bound)
        b = jax.random.uniform(kb, (1, fan_out), jnp.float32, -bound, bound)
        return w, b

    ks = jax.random.split(key, 5)
    w1, b1 = linear(ks[0], num_objectives, hidden_dim)
    w2, b2 = linear(ks[1], hidden_dim, num_objectives)
    p1, pb1 = linear(ks[2], num_objectives, hidden_dim)
    p2, pb2 = linear(ks[3], hidden_dim, hidden_dim)
    p3, pb3 = linear(ks[4], hidden_dim, num_objectives)
    return dict(w1=w1, b1=b1, w2=w2, b2=b2,
                p1=p1, pb1=pb1, p2=p2, pb2=pb2, p3=p3, pb3=pb3)


def _reference(objectives, p):
    h = jnp.maximum(objectives @ p["w1"] + p["b1"], 0.0)
    weights = jax.nn.softmax(h @ p["w2"] + p["b2"], axis=-1)
    h1 = jnp.maximum(objectives @ p["p1"] + p["pb1"], 0.0)
    h2 = jnp.maximum(h1 @ p["p2"] + p["pb2"], 0.0)
    pareto = h2 @ p["p3"] + p["pb3"]
    return weights, pareto


if __name__ == "__main__":
    num_objectives = 4

    key = jax.random.PRNGKey(0)
    k_params, k_small, k_big, k_params_256, k_mid = jax.random.split(key, 5)

    # ---- small shape consistent with the module (single grid step), hidden=32 ----
    params = init_params(k_params, num_objectives, 32)
    x_small = jax.random.normal(k_small, (8, num_objectives), jnp.float32)
    w_s, p_s = multi_objective_optimization(x_small, params)
    w_s = jax.block_until_ready(w_s)
    p_s = jax.block_until_ready(p_s)
    rw_s, rp_s = _reference(x_small, params)
    assert jnp.allclose(w_s, rw_s, atol=1e-5, rtol=1e-5)
    assert jnp.allclose(p_s, rp_s, atol=1e-5, rtol=1e-5)
    assert jnp.allclose(jnp.sum(w_s, axis=-1), 1.0, atol=1e-5)

    # ---- larger batch exercises the multi-step batch grid (8 tiles of 512) ----
    x_big = jax.random.normal(k_big, (4096, num_objectives), jnp.float32)
    w_b, p_b = multi_objective_optimization(x_big, params)
    w_b = jax.block_until_ready(w_b)
    p_b = jax.block_until_ready(p_b)
    rw_b, rp_b = _reference(x_big, params)
    assert jnp.allclose(w_b, rw_b, atol=1e-5, rtol=1e-5)
    assert jnp.allclose(p_b, rp_b, atol=1e-5, rtol=1e-5)
    assert jnp.allclose(jnp.sum(w_b, axis=-1), 1.0, atol=1e-5)

    # ---- module-default hidden_dim=256 (exercises h_pad=256 path) ----
    # Loose tolerance: at K=256 the Mosaic f32 matmul and XLA's default f32
    # matmul may use different MXU pass counts; exact equivalence is already
    # asserted above at hidden=32.
    params_256 = init_params(k_params_256, num_objectives, 256)
    x_mid = jax.random.normal(k_mid, (1024, num_objectives), jnp.float32)
    w_m, p_m = multi_objective_optimization(x_mid, params_256)
    w_m = jax.block_until_ready(w_m)
    p_m = jax.block_until_ready(p_m)
    rw_m, rp_m = _reference(x_mid, params_256)
    assert bool(jnp.all(jnp.isfinite(w_m))) and bool(jnp.all(jnp.isfinite(p_m)))
    assert jnp.allclose(w_m, rw_m, atol=1e-2, rtol=1e-2)
    assert jnp.allclose(p_m, rp_m, atol=1e-2, rtol=1e-2)
    assert jnp.allclose(jnp.sum(w_m, axis=-1), 1.0, atol=1e-5)

    print("KERNEL_OK")
</pallas_src>

<mosaic_0001>
module attributes {stable_mosaic.version = 11 : i64} {
  func.func @_multi_objective_kernel(%arg0: i32, %arg1: memref<8x4xf32, #tpu.memory_space<vmem>>, %arg2: memref<4x256xf32, #tpu.memory_space<vmem>>, %arg3: memref<1x256xf32, #tpu.memory_space<vmem>>, %arg4: memref<128x128xf32, #tpu.memory_space<vmem>>, %arg5: memref<1x128xf32, #tpu.memory_space<vmem>>, %arg6: memref<128x128xf32, #tpu.memory_space<vmem>>, %arg7: memref<1x128xf32, #tpu.memory_space<vmem>>, %arg8: memref<128x128xf32, #tpu.memory_space<vmem>>, %arg9: memref<1x128xf32, #tpu.memory_space<vmem>>, %arg10: memref<8x256xf32, #tpu.memory_space<vmem>>) attributes {dimension_semantics = [#tpu.dimension_semantics<parallel>], iteration_bounds = array<i64: 1>, scalar_prefetch = 0 : i64, scratch_operands = 0 : i64, tpu.core_type = #tpu.core_type<tc>, window_params = [{transform_indices = @transform_0, window_bounds = array<i64: 8, 4>}, {pipeline_mode = #tpu.pipeline_mode<synchronous>, transform_indices = @transform_1, window_bounds = array<i64: 4, 256>}, {pipeline_mode = #tpu.pipeline_mode<synchronous>, transform_indices = @transform_2, window_bounds = array<i64: 1, 256>}, {pipeline_mode = #tpu.pipeline_mode<synchronous>, transform_indices = @transform_3, window_bounds = array<i64: 128, 128>}, {pipeline_mode = #tpu.pipeline_mode<synchronous>, transform_indices = @transform_4, window_bounds = array<i64: 1, 128>}, {pipeline_mode = #tpu.pipeline_mode<synchronous>, transform_indices = @transform_5, window_bounds = array<i64: 128, 128>}, {pipeline_mode = #tpu.pipeline_mode<synchronous>, transform_indices = @transform_6, window_bounds = array<i64: 1, 128>}, {pipeline_mode = #tpu.pipeline_mode<synchronous>, transform_indices = @transform_7, window_bounds = array<i64: 128, 128>}, {pipeline_mode = #tpu.pipeline_mode<synchronous>, transform_indices = @transform_8, window_bounds = array<i64: 1, 128>}, {transform_indices = @transform_9, window_bounds = array<i64: 8, 256>}]} {
    %c0 = arith.constant 0 : index
    %c0_0 = arith.constant 0 : index
    %0 = vector.load %arg1[%c0, %c0_0] : memref<8x4xf32, #tpu.memory_space<vmem>>, vector<8x4xf32>
    %c0_1 = arith.constant 0 : index
    %c0_2 = arith.constant 0 : index
    %1 = vector.load %arg2[%c0_1, %c0_2] : memref<4x256xf32, #tpu.memory_space<vmem>>, vector<4x256xf32>
    %cst = arith.constant dense<0.000000e+00> : vector<8x256xf32>
    %2 = tpu.matmul %0, %1, %cst {dimension_numbers = #tpu.dot_dimension_numbers<[1], [0], [0], [1], [0, 0, 1, 1], [], []>} : vector<8x4xf32>, vector<4x256xf32>, vector<8x256xf32> -> vector<8x256xf32>
    %c0_3 = arith.constant 0 : index
    %c0_4 = arith.constant 0 : index
    %3 = vector.load %arg3[%c0_3, %c0_4] : memref<1x256xf32, #tpu.memory_space<vmem>>, vector<1x256xf32>
    %4 = vector.broadcast %3 : vector<1x256xf32> to vector<8x256xf32>
    %5 = arith.addf %2, %4 : vector<8x256xf32>
    %cst_5 = arith.constant 0.000000e+00 : f32
    %6 = vector.broadcast %cst_5 : f32 to vector<8x256xf32>
    %7 = arith.maximumf %5, %6 : vector<8x256xf32>
    %8 = vector.extract_strided_slice %7 {offsets = [0, 0], sizes = [8, 128], strides = [1, 1]} : vector<8x256xf32> to vector<8x128xf32>
    %9 = vector.extract_strided_slice %7 {offsets = [0, 128], sizes = [8, 128], strides = [1, 1]} : vector<8x256xf32> to vector<8x128xf32>
    %c0_6 = arith.constant 0 : index
    %c0_7 = arith.constant 0 : index
    %10 = vector.load %arg4[%c0_6, %c0_7] : memref<128x128xf32, #tpu.memory_space<vmem>>, vector<128x128xf32>
    %cst_8 = arith.constant dense<0.000000e+00> : vector<8x128xf32>
    %11 = tpu.matmul %8, %10, %cst_8 {dimension_numbers = #tpu.dot_dimension_numbers<[1], [0], [0], [1], [0, 0, 1, 1], [], []>} : vector<8x128xf32>, vector<128x128xf32>, vector<8x128xf32> -> vector<8x128xf32>
    %c0_9 = arith.constant 0 : index
    %c0_10 = arith.constant 0 : index
    %12 = vector.load %arg5[%c0_9, %c0_10] : memref<1x128xf32, #tpu.memory_space<vmem>>, vector<1x128xf32>
    %13 = vector.broadcast %12 : vector<1x128xf32> to vector<8x128xf32>
    %14 = arith.addf %11, %13 : vector<8x128xf32>
    %cst_11 = arith.constant dense<0xFF800000> : vector<8xf32>
    %15 = vector.multi_reduction <maximumf>, %14, %cst_11 [1] : vector<8x128xf32> to vector<8xf32>
    %16 = vector.shape_cast %15 : vector<8xf32> to vector<8x1xf32>
    %17 = vector.broadcast %16 : vector<8x1xf32> to vector<8x128xf32>
    %18 = arith.subf %14, %17 : vector<8x128xf32>
    %19 = math.exp %18 : vector<8x128xf32>
    %cst_12 = arith.constant dense<0.000000e+00> : vector<8xf32>
    %20 = vector.multi_reduction <add>, %19, %cst_12 [1] : vector<8x128xf32> to vector<8xf32>
    %21 = vector.shape_cast %20 : vector<8xf32> to vector<8x1xf32>
    %22 = tpu.reciprocal %21 {approx = true} : vector<8x1xf32> -> vector<8x1xf32>
    %23 = arith.mulf %21, %22 : vector<8x1xf32>
    %cst_13 = arith.constant 2.000000e+00 : f32
    %24 = vector.broadcast %cst_13 : f32 to vector<8x1xf32>
    %25 = arith.subf %24, %23 : vector<8x1xf32>
    %26 = arith.mulf %22, %25 : vector<8x1xf32>
    %27 = vector.broadcast %26 : vector<8x1xf32> to vector<8x128xf32>
    %28 = arith.mulf %19, %27 : vector<8x128xf32>
    %c0_14 = arith.constant 0 : index
    %c0_15 = arith.constant 0 : index
    %29 = vector.load %arg6[%c0_14, %c0_15] : memref<128x128xf32, #tpu.memory_space<vmem>>, vector<128x128xf32>
    %cst_16 = arith.constant dense<0.000000e+00> : vector<8x128xf32>
    %30 = tpu.matmul %9, %29, %cst_16 {dimension_numbers = #tpu.dot_dimension_numbers<[1], [0], [0], [1], [0, 0, 1, 1], [], []>} : vector<8x128xf32>, vector<128x128xf32>, vector<8x128xf32> -> vector<8x128xf32>
    %c0_17 = arith.constant 0 : index
    %c0_18 = arith.constant 0 : index
    %31 = vector.load %arg7[%c0_17, %c0_18] : memref<1x128xf32, #tpu.memory_space<vmem>>, vector<1x128xf32>
    %32 = vector.broadcast %31 : vector<1x128xf32> to vector<8x128xf32>
    %33 = arith.addf %30, %32 : vector<8x128xf32>
    %cst_19 = arith.constant 0.000000e+00 : f32
    %34 = vector.broadcast %cst_19 : f32 to vector<8x128xf32>
    %35 = arith.maximumf %33, %34 : vector<8x128xf32>
    %c0_20 = arith.constant 0 : index
    %c0_21 = arith.constant 0 : index
    %36 = vector.load %arg8[%c0_20, %c0_21] : memref<128x128xf32, #tpu.memory_space<vmem>>, vector<128x128xf32>
    %cst_22 = arith.constant dense<0.000000e+00> : vector<8x128xf32>
    %37 = tpu.matmul %35, %36, %cst_22 {dimension_numbers = #tpu.dot_dimension_numbers<[1], [0], [0], [1], [0, 0, 1, 1], [], []>} : vector<8x128xf32>, vector<128x128xf32>, vector<8x128xf32> -> vector<8x128xf32>
    %c0_23 = arith.constant 0 : index
    %c0_24 = arith.constant 0 : index
    %38 = vector.load %arg9[%c0_23, %c0_24] : memref<1x128xf32, #tpu.memory_space<vmem>>, vector<1x128xf32>
    %39 = vector.broadcast %38 : vector<1x128xf32> to vector<8x128xf32>
    %40 = arith.addf %37, %39 : vector<8x128xf32>
    %c0_25 = arith.constant 0 : index
    %c0_26 = arith.constant 0 : index
    %41 = vector.load %arg10[%c0_25, %c0_26] : memref<8x256xf32, #tpu.memory_space<vmem>>, vector<8x128xf32>
    tpu.vector_store %arg10[%c0_25, %c0_26], %28 {strides = array<i32>} : memref<8x256xf32, #tpu.memory_space<vmem>>, vector<8x128xf32>,
    %c0_27 = arith.constant 0 : index
    %c128 = arith.constant 128 : index
    %42 = vector.load %arg10[%c0_27, %c128] : memref<8x256xf32, #tpu.memory_space<vmem>>, vector<8x128xf32>
    tpu.vector_store %arg10[%c0_27, %c128], %40 {strides = array<i32>} : memref<8x256xf32, #tpu.memory_space<vmem>>, vector<8x128xf32>,
    return
  }
  func.func @transform_0(%arg0: i32) -> (i32, i32) {
    %c0_i32 = arith.constant 0 : i32
    %c0_i32_0 = arith.constant 0 : i32
    return %arg0, %c0_i32 : i32, i32
  }
  func.func @transform_1(%arg0: i32) -> (i32, i32) {
    %c0_i32 = arith.constant 0 : i32
    %c0_i32_0 = arith.constant 0 : i32
    %c0_i32_1 = arith.constant 0 : i32
    return %c0_i32, %c0_i32_0 : i32, i32
  }
  func.func @transform_2(%arg0: i32) -> (i32, i32) {
    %c0_i32 = arith.constant 0 : i32
    %c0_i32_0 = arith.constant 0 : i32
    %c0_i32_1 = arith.constant 0 : i32
    return %c0_i32, %c0_i32_0 : i32, i32
  }
  func.func @transform_3(%arg0: i32) -> (i32, i32) {
    %c0_i32 = arith.constant 0 : i32
    %c0_i32_0 = arith.constant 0 : i32
    %c0_i32_1 = arith.constant 0 : i32
    return %c0_i32, %c0_i32_0 : i32, i32
  }
  func.func @transform_4(%arg0: i32) -> (i32, i32) {
    %c0_i32 = arith.constant 0 : i32
    %c0_i32_0 = arith.constant 0 : i32
    %c0_i32_1 = arith.constant 0 : i32
    return %c0_i32, %c0_i32_0 : i32, i32
  }
  func.func @transform_5(%arg0: i32) -> (i32, i32) {
    %c0_i32 = arith.constant 0 : i32
    %c0_i32_0 = arith.constant 0 : i32
    %c0_i32_1 = arith.constant 0 : i32
    return %c0_i32, %c0_i32_0 : i32, i32
  }
  func.func @transform_6(%arg0: i32) -> (i32, i32) {
    %c0_i32 = arith.constant 0 : i32
    %c0_i32_0 = arith.constant 0 : i32
    %c0_i32_1 = arith.constant 0 : i32
    return %c0_i32, %c0_i32_0 : i32, i32
  }
  func.func @transform_7(%arg0: i32) -> (i32, i32) {
    %c0_i32 = arith.constant 0 : i32
    %c0_i32_0 = arith.constant 0 : i32
    %c0_i32_1 = arith.constant 0 : i32
    return %c0_i32, %c0_i32_0 : i32, i32
  }
  func.func @transform_8(%arg0: i32) -> (i32, i32) {
    %c0_i32 = arith.constant 0 : i32
    %c0_i32_0 = arith.constant 0 : i32
    %c0_i32_1 = arith.constant 0 : i32
    return %c0_i32, %c0_i32_0 : i32, i32
  }
  func.func @transform_9(%arg0: i32) -> (i32, i32) {
    %c0_i32 = arith.constant 0 : i32
    %c0_i32_0 = arith.constant 0 : i32
    return %arg0, %c0_i32 : i32, i32
  }
}

</mosaic_0001>

<llo_original>
// kernel: tpu_custom_call.1
$region0: #{tpu_custom_call.1}
  #allocation0 [shape = 'u32[]', space=smem, size = 0x4, offset = 0x4, fixed_abs, tag = 'smem constant byte address 0x4 - core index']
  #allocation1 [shape = 'u32[144,128]{1,0:T(1,128)}', space=vmem, size = 0x12000, scoped, tag = 'internal scratch']
  %s0 = inlined_call_operand.vmem [shape: f32[8,4], index: 0, kind: input, shape index: {}]
  %s1 = inlined_call_operand.vmem [shape: f32[4,256], index: 1, kind: input, shape index: {}]
  %s2 = inlined_call_operand.vmem [shape: f32[1,256], index: 2, kind: input, shape index: {}]
  %s3 = inlined_call_operand.hbm [shape: f32[128,128], index: 3, kind: input, shape index: {}]
  %s4 = inlined_call_operand.vmem [shape: f32[1,128], index: 4, kind: input, shape index: {}]
  %s5 = inlined_call_operand.hbm [shape: f32[128,128], index: 5, kind: input, shape index: {}]
  %s6 = inlined_call_operand.vmem [shape: f32[1,128], index: 6, kind: input, shape index: {}]
  %s7 = inlined_call_operand.hbm [shape: f32[128,128], index: 7, kind: input, shape index: {}]
  %s8 = inlined_call_operand.vmem [shape: f32[1,128], index: 8, kind: input, shape index: {}]
  %s9 = inlined_call_operand.hbm [shape: f32[8,256], index: 9, kind: output, shape index: {}]
  %s10 = sld [smem:[#allocation0]]
  $region58: #{tpu_custom_call.1} parent=0
    _
  %s12 = ssub.s32 1, %s10
  %s13 = scalar_select 0, %s12, %s10
  $region1: #{tpu_custom_call.1} parent=0
    #allocation2 [shape = 'u8[65536]{0}', space=vmem, size = 0x10000, scoped, tag = 'input window, operand 3, single buffered']
    #allocation3 [shape = 's32[1]{0}', space=sflag, size = 0x4, scoped, tag = 'scoped memory for tpu_custom_call.1']
    #allocation4 [shape = 's32[1]{0}', space=sflag, size = 0x4, scoped, tag = 'scoped memory for tpu_custom_call.1']
    #allocation5 [shape = 'u8[65536]{0}', space=vmem, size = 0x10000, scoped, tag = 'input window, operand 5, single buffered']
    #allocation6 [shape = 's32[1]{0}', space=sflag, size = 0x4, scoped, tag = 'scoped memory for tpu_custom_call.1']
    #allocation7 [shape = 'u8[65536]{0}', space=vmem, size = 0x10000, scoped, tag = 'input window, operand 7, single buffered']
    #allocation8 [shape = 'u8[8192]{0}', space=vmem, size = 0x2000, scoped, tag = 'output window, operand 0, single buffered']
    %14 = vsyncpa [#allocation3], 0
    %15 = vsyncpa [#allocation6], 0
    %16 = vsyncpa [#allocation4], 0
    // Predicated region
    $region2: #{tpu_custom_call.1} parent=1 // pred_check
      _
    $region3: #{tpu_custom_call.1} parent=1 // pred_check_branch
      %18 = sbr.rel (0) target = $region5
    $region4: #{tpu_custom_call.1} parent=1 // pred_region
      _
    $region5: #{tpu_custom_call.1} parent=1 // pred_fallthru
      _
    // Predicated region
    $region6: #{tpu_custom_call.1} parent=1 // pred_check
      _
    $region7: #{tpu_custom_call.1} parent=1 // pred_check_branch
      %20 = sbr.rel (0) target = $region9
    $region8: #{tpu_custom_call.1} parent=1 // pred_region
      _
    $region9: #{tpu_custom_call.1} parent=1 // pred_fallthru
      _
    // Predicated region
    $region10: #{tpu_custom_call.1} parent=1 // pred_check
      _
    $region11: #{tpu_custom_call.1} parent=1 // pred_check_branch
      %22 = sbr.rel (0) target = $region13
    $region12: #{tpu_custom_call.1} parent=1 // pred_region
      _
    $region13: #{tpu_custom_call.1} parent=1 // pred_fallthru
      _
    // Predicated region
    $region14: #{tpu_custom_call.1} parent=1 // pred_check
      _
    $region15: #{tpu_custom_call.1} parent=1 // pred_check_branch
      %24 = sbr.rel (0) target = $region17
    $region16: #{tpu_custom_call.1} parent=1 // pred_region
      %s26 = ssub.s32 2048, 2048
      %27 = vsyncadd [#allocation3], %s26
      %s28 = sshll.u32 [#allocation2], 4
      %s29 = int_to_ptr.vmem [resolvable:$true] %s28
      %34 = dma.hbm_to_vmem [thread:$0]  %s3, 2048, %s29, [#allocation3], 128, 128, 8
    $region17: #{tpu_custom_call.1} parent=1 // pred_fallthru
      _
    // Predicated region
    $region18: #{tpu_custom_call.1} parent=1 // pred_check
      _
    $region19: #{tpu_custom_call.1} parent=1 // pred_check_branch
      %36 = sbr.rel (0) target = $region21
    $region20: #{tpu_custom_call.1} parent=1 // pred_region
      _
    $region21: #{tpu_custom_call.1} parent=1 // pred_fallthru
      _
    // Predicated region
    $region22: #{tpu_custom_call.1} parent=1 // pred_check
      _
    $region23: #{tpu_custom_call.1} parent=1 // pred_check_branch
      %38 = sbr.rel (0) target = $region25
    $region24: #{tpu_custom_call.1} parent=1 // pred_region
      %s40 = ssub.s32 2048, 2048
      %41 = vsyncadd [#allocation6], %s40
      %s42 = sshll.u32 [#allocation5], 4
      %s43 = int_to_ptr.vmem [resolvable:$true] %s42
      %48 = dma.hbm_to_vmem [thread:$0]  %s5, 2048, %s43, [#allocation6], 128, 128, 8
    $region25: #{tpu_custom_call.1} parent=1 // pred_fallthru
      _
    // Predicated region
    $region26: #{tpu_custom_call.1} parent=1 // pred_check
      _
    $region27: #{tpu_custom_call.1} parent=1 // pred_check_branch
      %50 = sbr.rel (0) target = $region29
    $region28: #{tpu_custom_call.1} parent=1 // pred_region
      _
    $region29: #{tpu_custom_call.1} parent=1 // pred_fallthru
      _
    // Predicated region
    $region30: #{tpu_custom_call.1} parent=1 // pred_check
      _
    $region31: #{tpu_custom_call.1} parent=1 // pred_check_branch
      %52 = sbr.rel (0) target = $region33
    $region32: #{tpu_custom_call.1} parent=1 // pred_region
      %s54 = ssub.s32 2048, 2048
      %55 = vsyncadd [#allocation6], %s54
      %s56 = sshll.u32 [#allocation7], 4
      %s57 = int_to_ptr.vmem [resolvable:$true] %s56
      %62 = dma.hbm_to_vmem [thread:$0]  %s7, 2048, %s57, [#allocation6], 128, 128, 8
    $region33: #{tpu_custom_call.1} parent=1 // pred_fallthru
      _
    // Predicated region
    $region34: #{tpu_custom_call.1} parent=1 // pred_check
      _
    $region35: #{tpu_custom_call.1} parent=1 // pred_check_branch
      %64 = sbr.rel (0) target = $region37
    $region36: #{tpu_custom_call.1} parent=1 // pred_region
      _
    $region37: #{tpu_custom_call.1} parent=1 // pred_fallthru
      _
    // Predicated region
    $region38: #{tpu_custom_call.1} parent=1 // pred_check
      _
    $region39: #{tpu_custom_call.1} parent=1 // pred_check_branch
      %66 = sbr.rel (0) target = $region41
    $region40: #{tpu_custom_call.1} parent=1 // pred_region
      %67 = dma.done [#allocation3], 2048
    $region41: #{tpu_custom_call.1} parent=1 // pred_fallthru
      _
    // Predicated region
    $region42: #{tpu_custom_call.1} parent=1 // pred_check
      _
    $region43: #{tpu_custom_call.1} parent=1 // pred_check_branch
      %69 = sbr.rel (0) target = $region45
    $region44: #{tpu_custom_call.1} parent=1 // pred_region
      %70 = dma.done [#allocation6], 2048
    $region45: #{tpu_custom_call.1} parent=1 // pred_fallthru
      _
    // Predicated region
    $region46: #{tpu_custom_call.1} parent=1 // pred_check
      _
    $region47: #{tpu_custom_call.1} parent=1 // pred_check_branch
      %72 = sbr.rel (0) target = $region49
    $region48: #{tpu_custom_call.1} parent=1 // pred_region
      %73 = dma.done [#allocation6], 2048
    $region49: #{tpu_custom_call.1} parent=1 // pred_fallthru
      _
    %v74 = vld [vmem:[%s0] sm:$0xff]
    %v75 = vld [vmem:[%s1] sm:$0xff]
    %v76 = vld [vmem:[%s2] sm:$0x3]
    %v78 = vlaneseq
    %v79 = vshrl.u32 %v78, 7
    %v80 = vsub.s32 0, %v79
    %v81 = vrot.slane %v76, %v80
    %v82 = vlaneseq
    %v83 = vshrl.u32 %v82, 7
    %v84 = vsub.s32 1, %v83
    %v85 = vrot.slane %v76, %v84
    %v89 = vcombine.high %v75, %v75
    %vm90 = vcmask 31744
    %v92 = vsel %vm90, %v74, 0
    %vm94 = vcmask 1043456
    %v95 = vsel %vm94, %v75, 0
    %v97 = vsel %vm94, %v89, 0
    %99 = vmatprep.subr.mxu0 0.0
    %100 = vmatpush1.msra.mxu0 0.0
    %101 = vmatprep.subr.mxu0 0.0
    %102 = vmatpush1.msra.mxu0 0.0
    %103 = vmatprep.subr.mxu0 0.0
    %104 = vmatpush1.msra.mxu0 0.0
    %105 = vmatprep.subr.mxu0 0.0
    %106 = vmatpush1.msra.mxu0 0.0
    %107 = vmatprep.subr.mxu0 0.0
    %108 = vmatpush1.msra.mxu0 0.0
    %109 = vmatprep.subr.mxu0 0.0
    %110 = vmatpush1.msra.mxu0 0.0
    %111 = vmatprep.subr.mxu0 0.0
    %112 = vmatpush1.msra.mxu0 0.0
    %113 = vmatprep.subr.mxu0 0.0
    %114 = vmatpush1.msra.mxu0 0.0
    %115 = vmatprep.subr.mxu0 0.0
    %116 = vmatpush1.msra.mxu0 0.0
    %117 = vmatprep.subr.mxu0 0.0
    %118 = vmatpush1.msra.mxu0 0.0
    %119 = vmatprep.subr.mxu0 0.0
    %120 = vmatpush1.msra.mxu0 0.0
    %121 = vmatprep.subr.mxu0 0.0
    %122 = vmatpush1.msra.mxu0 0.0
    %123 = vmatprep.subr.mxu0 0.0
    %124 = vmatpush1.msra.mxu0 0.0
    %125 = vmatprep.subr.mxu0 0.0
    %126 = vmatpush1.msra.mxu0 0.0
    %127 = vmatprep.subr.mxu0 0.0
    %128 = vmatpush1.msra.mxu0 0.0
    %129 = vmatprep.subr.mxu0 %v97
    %130 = vmatpush1.msra.mxu0 %v95
    %131 = vmatprep.subr.mxu0 0.0
    %132 = vmatpush2.msra.mxu0 0.0
    %133 = vmatprep.subr.mxu0 0.0
    %134 = vmatpush2.msra.mxu0 0.0
    %135 = vmatprep.subr.mxu0 0.0
    %136 = vmatpush2.msra.mxu0 0.0
    %137 = vmatprep.subr.mxu0 0.0
    %138 = vmatpush2.msra.mxu0 0.0
    %139 = vmatprep.subr.mxu0 0.0
    %140 = vmatpush2.msra.mxu0 0.0
    %141 = vmatprep.subr.mxu0 0.0
    %142 = vmatpush2.msra.mxu0 0.0
    %143 = vmatprep.subr.mxu0 0.0
    %144 = vmatpush2.msra.mxu0 0.0
    %145 = vmatprep.subr.mxu0 0.0
    %146 = vmatpush2.msra.mxu0 0.0
    %147 = vmatprep.subr.mxu0 0.0
    %148 = vmatpush2.msra.mxu0 0.0
    %149 = vmatprep.subr.mxu0 0.0
    %150 = vmatpush2.msra.mxu0 0.0
    %151 = vmatprep.subr.mxu0 0.0
    %152 = vmatpush2.msra.mxu0 0.0
    %153 = vmatprep.subr.mxu0 0.0
    %154 = vmatpush2.msra.mxu0 0.0
    %155 = vmatprep.subr.mxu0 0.0
    %156 = vmatpush2.msra.mxu0 0.0
    %157 = vmatprep.subr.mxu0 0.0
    %158 = vmatpush2.msra.mxu0 0.0
    %159 = vmatprep.subr.mxu0 0.0
    %160 = vmatpush2.msra.mxu0 0.0
    %161 = vmatprep.subr.mxu0 0.0
    %162 = vmatpush2.msra.mxu0 0.0
    %163 = vmatprep.mubr.f32.mxu0 0.0
    %164 = vmatmul.mubr.f32.gmra.mxu0 %v92
    %v165 = vpop.f32.mrf.mxu0
    %v166 = vadd.f32 %v81, %v165
    %v167 = vpop.f32.mrf.mxu0
    %v168 = vadd.f32 %v85, %v167
    %169 = vdwg.mxu0
    %v170 = vmax.f32 %v166, 0.0
    %v171 = vmax.f32 %v168, 0.0
    %v172 = vld [vmem:[#allocation2] sm:$0xff]
    %v173 = vld [vmem:[#allocation2 + $0x8] sm:$0xff]
    %v174 = vld [vmem:[#allocation2 + $0x10] sm:$0xff]
    %v175 = vld [vmem:[#allocation2 + $0x18] sm:$0xff]
    %v176 = vld [vmem:[#allocation2 + $0x20] sm:$0xff]
    %v177 = vld [vmem:[#allocation2 + $0x28] sm:$0xff]
    %v178 = vld [vmem:[#allocation2 + $0x30] sm:$0xff]
    %v179 = vld [vmem:[#allocation2 + $0x38] sm:$0xff]
    %v180 = vld [vmem:[#allocation2 + $0x40] sm:$0xff]
    %v181 = vld [vmem:[#allocation2 + $0x48] sm:$0xff]
    %v182 = vld [vmem:[#allocation2 + $0x50] sm:$0xff]
    %v183 = vld [vmem:[#allocation2 + $0x58] sm:$0xff]
    %v184 = vld [vmem:[#allocation2 + $0x60] sm:$0xff]
    %v185 = vld [vmem:[#allocation2 + $0x68] sm:$0xff]
    %v186 = vld [vmem:[#allocation2 + $0x70] sm:$0xff]
    %v187 = vld [vmem:[#allocation2 + $0x78] sm:$0xff]
    %v188 = vld [vmem:[%s4] sm:$0x1]
    %v190 = vlaneseq
    %v191 = vshrl.u32 %v190, 7
    %v192 = vsub.s32 0, %v191
    %v193 = vrot.slane %v188, %v192
    %195 = vmatprep.subr.mxu0 0.0
    %196 = vmatpush1.msra.mxu0 %v187
    %197 = vmatprep.subr.mxu0 0.0
    %198 = vmatpush1.msra.mxu0 %v186
    %199 = vmatprep.subr.mxu0 0.0
    %200 = vmatpush1.msra.mxu0 %v185
    %201 = vmatprep.subr.mxu0 0.0
    %202 = vmatpush1.msra.mxu0 %v184
    %203 = vmatprep.subr.mxu0 0.0
    %204 = vmatpush1.msra.mxu0 %v183
    %205 = vmatprep.subr.mxu0 0.0
    %206 = vmatpush1.msra.mxu0 %v182
    %207 = vmatprep.subr.mxu0 0.0
    %208 = vmatpush1.msra.mxu0 %v181
    %209 = vmatprep.subr.mxu0 0.0
    %210 = vmatpush1.msra.mxu0 %v180
    %211 = vmatprep.subr.mxu0 0.0
    %212 = vmatpush1.msra.mxu0 %v179
    %213 = vmatprep.subr.mxu0 0.0
    %214 = vmatpush1.msra.mxu0 %v178
    %215 = vmatprep.subr.mxu0 0.0
    %216 = vmatpush1.msra.mxu0 %v177
    %217 = vmatprep.subr.mxu0 0.0
    %218 = vmatpush1.msra.mxu0 %v176
    %219 = vmatprep.subr.mxu0 0.0
    %220 = vmatpush1.msra.mxu0 %v175
    %221 = vmatprep.subr.mxu0 0.0
    %222 = vmatpush1.msra.mxu0 %v174
    %223 = vmatprep.subr.mxu0 0.0
    %224 = vmatpush1.msra.mxu0 %v173
    %225 = vmatprep.subr.mxu0 0.0
    %226 = vmatpush1.msra.mxu0 %v172
    %227 = vmatprep.subr.mxu0 0.0
    %228 = vmatpush2.msra.mxu0 0.0
    %229 = vmatprep.subr.mxu0 0.0
    %230 = vmatpush2.msra.mxu0 0.0
    %231 = vmatprep.subr.mxu0 0.0
    %232 = vmatpush2.msra.mxu0 0.0
    %233 = vmatprep.subr.mxu0 0.0
    %234 = vmatpush2.msra.mxu0 0.0
    %235 = vmatprep.subr.mxu0 0.0
    %236 = vmatpush2.msra.mxu0 0.0
    %237 = vmatprep.subr.mxu0 0.0
    %238 = vmatpush2.msra.mxu0 0.0
    %239 = vmatprep.subr.mxu0 0.0
    %240 = vmatpush2.msra.mxu0 0.0
    %241 = vmatprep.subr.mxu0 0.0
    %242 = vmatpush2.msra.mxu0 0.0
    %243 = vmatprep.subr.mxu0 0.0
    %244 = vmatpush2.msra.mxu0 0.0
    %245 = vmatprep.subr.mxu0 0.0
    %246 = vmatpush2.msra.mxu0 0.0
    %247 = vmatprep.subr.mxu0 0.0
    %248 = vmatpush2.msra.mxu0 0.0
    %249 = vmatprep.subr.mxu0 0.0
    %250 = vmatpush2.msra.mxu0 0.0
    %251 = vmatprep.subr.mxu0 0.0
    %252 = vmatpush2.msra.mxu0 0.0
    %253 = vmatprep.subr.mxu0 0.0
    %254 = vmatpush2.msra.mxu0 0.0
    %255 = vmatprep.subr.mxu0 0.0
    %256 = vmatpush2.msra.mxu0 0.0
    %257 = vmatprep.subr.mxu0 0.0
    %258 = vmatpush2.msra.mxu0 0.0
    %259 = vmatprep.mubr.f32.mxu0 0.0
    %260 = vmatmul.mubr.f32.gmra.mxu0 %v170
    %v261 = vpop.f32.mrf.mxu0
    %v262 = vadd.f32 %v193, %v261
    %v263 = vpop.f32.mrf.mxu0
    %264 = vdwg.mxu0
    %265 = vmax.xlane.f32.xlu0 %v262
    %v266 = vpop.xlane.xlu0 %265
    %v267 = vsub.f32 %v262, %v266
    %v268 = vmul.f32 %v267, 1.442695
    %v269 = vpow.pop %v268
    %270 = vadd.xlane.f32.xlu0 %v269
    %v271 = vpop.xlane.xlu0 %270
    %v272 = vrcp.pop %v271
    %v273 = vmul.f32 %v271, %v272
    %v274 = vsub.f32 2.0, %v273
    %v275 = vmul.f32 %v272, %v274
    %v276 = vmul.f32 %v269, %v275
    %v277 = vld [vmem:[#allocation5] sm:$0xff]
    %v278 = vld [vmem:[#allocation5 + $0x8] sm:$0xff]
    %v279 = vld [vmem:[#allocation5 + $0x10] sm:$0xff]
    %v280 = vld [vmem:[#allocation5 + $0x18] sm:$0xff]
    %v281 = vld [vmem:[#allocation5 + $0x20] sm:$0xff]
    %v282 = vld [vmem:[#allocation5 + $0x28] sm:$0xff]
    %v283 = vld [vmem:[#allocation5 + $0x30] sm:$0xff]
    %v284 = vld [vmem:[#allocation5 + $0x38] sm:$0xff]
    %v285 = vld [vmem:[#allocation5 + $0x40] sm:$0xff]
    %v286 = vld [vmem:[#allocation5 + $0x48] sm:$0xff]
    %v287 = vld [vmem:[#allocation5 + $0x50] sm:$0xff]
    %v288 = vld [vmem:[#allocation5 + $0x58] sm:$0xff]
    %v289 = vld [vmem:[#allocation5 + $0x60] sm:$0xff]
    %v290 = vld [vmem:[#allocation5 + $0x68] sm:$0xff]
    %v291 = vld [vmem:[#allocation5 + $0x70] sm:$0xff]
    %v292 = vld [vmem:[#allocation5 + $0x78] sm:$0xff]
    %v293 = vld [vmem:[%s6] sm:$0x1]
    %v295 = vlaneseq
    %v296 = vshrl.u32 %v295, 7
    %v297 = vsub.s32 0, %v296
    %v298 = vrot.slane %v293, %v297
    %300 = vmatprep.subr.mxu0 0.0
    %301 = vmatpush1.msra.mxu0 %v292
    %302 = vmatprep.subr.mxu0 0.0
    %303 = vmatpush1.msra.mxu0 %v291
    %304 = vmatprep.subr.mxu0 0.0
    %305 = vmatpush1.msra.mxu0 %v290
    %306 = vmatprep.subr.mxu0 0.0
    %307 = vmatpush1.msra.mxu0 %v289
    %308 = vmatprep.subr.mxu0 0.0
    %309 = vmatpush1.msra.mxu0 %v288
    %310 = vmatprep.subr.mxu0 0.0
    %311 = vmatpush1.msra.mxu0 %v287
    %312 = vmatprep.subr.mxu0 0.0
    %313 = vmatpush1.msra.mxu0 %v286
    %314 = vmatprep.subr.mxu0 0.0
    %315 = vmatpush1.msra.mxu0 %v285
    %316 = vmatprep.subr.mxu0 0.0
    %317 = vmatpush1.msra.mxu0 %v284
    %318 = vmatprep.subr.mxu0 0.0
    %319 = vmatpush1.msra.mxu0 %v283
    %320 = vmatprep.subr.mxu0 0.0
    %321 = vmatpush1.msra.mxu0 %v282
    %322 = vmatprep.subr.mxu0 0.0
    %323 = vmatpush1.msra.mxu0 %v281
    %324 = vmatprep.subr.mxu0 0.0
    %325 = vmatpush1.msra.mxu0 %v280
    %326 = vmatprep.subr.mxu0 0.0
    %327 = vmatpush1.msra.mxu0 %v279
    %328 = vmatprep.subr.mxu0 0.0
    %329 = vmatpush1.msra.mxu0 %v278
    %330 = vmatprep.subr.mxu0 0.0
    %331 = vmatpush1.msra.mxu0 %v277
    %332 = vmatprep.subr.mxu0 0.0
    %333 = vmatpush2.msra.mxu0 0.0
    %334 = vmatprep.subr.mxu0 0.0
    %335 = vmatpush2.msra.mxu0 0.0
    %336 = vmatprep.subr.mxu0 0.0
    %337 = vmatpush2.msra.mxu0 0.0
    %338 = vmatprep.subr.mxu0 0.0
    %339 = vmatpush2.msra.mxu0 0.0
    %340 = vmatprep.subr.mxu0 0.0
    %341 = vmatpush2.msra.mxu0 0.0
    %342 = vmatprep.subr.mxu0 0.0
    %343 = vmatpush2.msra.mxu0 0.0
    %344 = vmatprep.subr.mxu0 0.0
    %345 = vmatpush2.msra.mxu0 0.0
    %346 = vmatprep.subr.mxu0 0.0
    %347 = vmatpush2.msra.mxu0 0.0
    %348 = vmatprep.subr.mxu0 0.0
    %349 = vmatpush2.msra.mxu0 0.0
    %350 = vmatprep.subr.mxu0 0.0
    %351 = vmatpush2.msra.mxu0 0.0
    %352 = vmatprep.subr.mxu0 0.0
    %353 = vmatpush2.msra.mxu0 0.0
    %354 = vmatprep.subr.mxu0 0.0
    %355 = vmatpush2.msra.mxu0 0.0
    %356 = vmatprep.subr.mxu0 0.0
    %357 = vmatpush2.msra.mxu0 0.0
    %358 = vmatprep.subr.mxu0 0.0
    %359 = vmatpush2.msra.mxu0 0.0
    %360 = vmatprep.subr.mxu0 0.0
    %361 = vmatpush2.msra.mxu0 0.0
    %362 = vmatprep.subr.mxu0 0.0
    %363 = vmatpush2.msra.mxu0 0.0
    %364 = vmatprep.mubr.f32.mxu0 0.0
    %365 = vmatmul.mubr.f32.gmra.mxu0 %v171
    %v366 = vpop.f32.mrf.mxu0
    %v367 = vadd.f32 %v298, %v366
    %v368 = vpop.f32.mrf.mxu0
    %369 = vdwg.mxu0
    %v370 = vmax.f32 %v367, 0.0
    %v371 = vld [vmem:[#allocation7] sm:$0xff]
    %v372 = vld [vmem:[#allocation7 + $0x8] sm:$0xff]
    %v373 = vld [vmem:[#allocation7 + $0x10] sm:$0xff]
    %v374 = vld [vmem:[#allocation7 + $0x18] sm:$0xff]
    %v375 = vld [vmem:[#allocation7 + $0x20] sm:$0xff]
    %v376 = vld [vmem:[#allocation7 + $0x28] sm:$0xff]
    %v377 = vld [vmem:[#allocation7 + $0x30] sm:$0xff]
    %v378 = vld [vmem:[#allocation7 + $0x38] sm:$0xff]
    %v379 = vld [vmem:[#allocation7 + $0x40] sm:$0xff]
    %v380 = vld [vmem:[#allocation7 + $0x48] sm:$0xff]
    %v381 = vld [vmem:[#allocation7 + $0x50] sm:$0xff]
    %v382 = vld [vmem:[#allocation7 + $0x58] sm:$0xff]
    %v383 = vld [vmem:[#allocation7 + $0x60] sm:$0xff]
    %v384 = vld [vmem:[#allocation7 + $0x68] sm:$0xff]
    %v385 = vld [vmem:[#allocation7 + $0x70] sm:$0xff]
    %v386 = vld [vmem:[#allocation7 + $0x78] sm:$0xff]
    %v387 = vld [vmem:[%s8] sm:$0x1]
    %v389 = vlaneseq
    %v390 = vshrl.u32 %v389, 7
    %v391 = vsub.s32 0, %v390
    %v392 = vrot.slane %v387, %v391
    %394 = vmatprep.subr.mxu0 0.0
    %395 = vmatpush1.msra.mxu0 %v386
    %396 = vmatprep.subr.mxu0 0.0
    %397 = vmatpush1.msra.mxu0 %v385
    %398 = vmatprep.subr.mxu0 0.0
    %399 = vmatpush1.msra.mxu0 %v384
    %400 = vmatprep.subr.mxu0 0.0
    %401 = vmatpush1.msra.mxu0 %v383
    %402 = vmatprep.subr.mxu0 0.0
    %403 = vmatpush1.msra.mxu0 %v382
    %404 = vmatprep.subr.mxu0 0.0
    %405 = vmatpush1.msra.mxu0 %v381
    %406 = vmatprep.subr.mxu0 0.0
    %407 = vmatpush1.msra.mxu0 %v380
    %408 = vmatprep.subr.mxu0 0.0
    %409 = vmatpush1.msra.mxu0 %v379
    %410 = vmatprep.subr.mxu0 0.0
    %411 = vmatpush1.msra.mxu0 %v378
    %412 = vmatprep.subr.mxu0 0.0
    %413 = vmatpush1.msra.mxu0 %v377
    %414 = vmatprep.subr.mxu0 0.0
    %415 = vmatpush1.msra.mxu0 %v376
    %416 = vmatprep.subr.mxu0 0.0
    %417 = vmatpush1.msra.mxu0 %v375
    %418 = vmatprep.subr.mxu0 0.0
    %419 = vmatpush1.msra.mxu0 %v374
    %420 = vmatprep.subr.mxu0 0.0
    %421 = vmatpush1.msra.mxu0 %v373
    %422 = vmatprep.subr.mxu0 0.0
    %423 = vmatpush1.msra.mxu0 %v372
    %424 = vmatprep.subr.mxu0 0.0
    %425 = vmatpush1.msra.mxu0 %v371
    %426 = vmatprep.subr.mxu0 0.0
    %427 = vmatpush2.msra.mxu0 0.0
    %428 = vmatprep.subr.mxu0 0.0
    %429 = vmatpush2.msra.mxu0 0.0
    %430 = vmatprep.subr.mxu0 0.0
    %431 = vmatpush2.msra.mxu0 0.0
    %432 = vmatprep.subr.mxu0 0.0
    %433 = vmatpush2.msra.mxu0 0.0
    %434 = vmatprep.subr.mxu0 0.0
    %435 = vmatpush2.msra.mxu0 0.0
    %436 = vmatprep.subr.mxu0 0.0
    %437 = vmatpush2.msra.mxu0 0.0
    %438 = vmatprep.subr.mxu0 0.0
    %439 = vmatpush2.msra.mxu0 0.0
    %440 = vmatprep.subr.mxu0 0.0
    %441 = vmatpush2.msra.mxu0 0.0
    %442 = vmatprep.subr.mxu0 0.0
    %443 = vmatpush2.msra.mxu0 0.0
    %444 = vmatprep.subr.mxu0 0.0
    %445 = vmatpush2.msra.mxu0 0.0
    %446 = vmatprep.subr.mxu0 0.0
    %447 = vmatpush2.msra.mxu0 0.0
    %448 = vmatprep.subr.mxu0 0.0
    %449 = vmatpush2.msra.mxu0 0.0
    %450 = vmatprep.subr.mxu0 0.0
    %451 = vmatpush2.msra.mxu0 0.0
    %452 = vmatprep.subr.mxu0 0.0
    %453 = vmatpush2.msra.mxu0 0.0
    %454 = vmatprep.subr.mxu0 0.0
    %455 = vmatpush2.msra.mxu0 0.0
    %456 = vmatprep.subr.mxu0 0.0
    %457 = vmatpush2.msra.mxu0 0.0
    %458 = vmatprep.mubr.f32.mxu0 0.0
    %459 = vmatmul.mubr.f32.gmra.mxu0 %v370
    %v460 = vpop.f32.mrf.mxu0
    %v461 = vadd.f32 %v392, %v460
    %v462 = vpop.f32.mrf.mxu0
    %463 = vdwg.mxu0
    %464 = vst [vmem:[#allocation8] sm:$0xff] %v276
    %465 = vst [vmem:[#allocation8 + $0x8] sm:$0xff] %v461
    // Predicated region
    $region50: #{tpu_custom_call.1} parent=1 // pred_check
      _
    $region51: #{tpu_custom_call.1} parent=1 // pred_check_branch
      %467 = sbr.rel (0) target = $region53
    $region52: #{tpu_custom_call.1} parent=1 // pred_region
      %s469 = ssub.s32 256, 256
      %470 = vsyncadd [#allocation4], %s469
      %s472 = sshll.u32 [#allocation8], 4
      %s473 = int_to_ptr.vmem [resolvable:$true] %s472
      %475 = dma.vmem_to_hbm [thread:$0]  %s473, 256, %s9, [#allocation4]
    $region53: #{tpu_custom_call.1} parent=1 // pred_fallthru
      _
    // Predicated region
    $region54: #{tpu_custom_call.1} parent=1 // pred_check
      _
    $region55: #{tpu_custom_call.1} parent=1 // pred_check_branch
      %477 = sbr.rel (0) target = $region57
    $region56: #{tpu_custom_call.1} parent=1 // pred_region
      %478 = dma.done [#allocation4], 256
    $region57: #{tpu_custom_call.1} parent=1 // pred_fallthru
      _
    %479 = vsyncpa [#allocation3], 1
    %480 = vsyncpa [#allocation6], 1
    %481 = vsyncpa [#allocation4], 1

</llo_original>
